<compile_context>
chip_gen: v6e
topology: v6e:2x2x1
jax: 0.10.0
libtpu: 0.0.40
codegen_flags: <defaults>
</compile_context>

<pallas_src>
import functools

import jax
import jax.numpy as jnp
from jax.experimental import pallas as pl
from jax.experimental.pallas import tpu as pltpu

LN_EPS = 1e-5  # torch.nn.LayerNorm default eps


def _score_kernel(tok_ref, wm_ref, scal_ref, score_ref):
    """Folded LayerNorm + Linear(dim->1) token score for one (bt, tn) block.

    tok_ref:   (bt, D, tn) VMEM — tokens, channels on sublanes, tokens on lanes
    wm_ref:    (8, D)      VMEM — row 0 = ones, row 1 = gamma*w, rest zero
    scal_ref:  (2,)        SMEM — [sum(gamma*w), beta@w + b]
    score_ref: (bt, tn)    VMEM — raw (pre-softmax) scores, lane-dense
    """
    bt, d, _ = tok_ref.shape
    inv_d = 1.0 / d
    wm = wm_ref[...]                      # (8, D) f32
    sum_gw = scal_ref[0]
    c = scal_ref[1]

    # Small static loop over the batch tile (bt is kept <= ~8 by the wrapper).
    for b in range(bt):
        xb = tok_ref[b].astype(jnp.float32)                                # (D, tn)
        # MXU: row 0 -> sum_d x, row 1 -> sum_d (gamma*w)*x.
        lin = jnp.dot(wm, xb, preferred_element_type=jnp.float32)          # (8, tn)
        # MXU: row 0 -> sum_d x^2.  Only one extra VPU mul per element.
        sq = jnp.dot(wm, xb * xb, preferred_element_type=jnp.float32)      # (8, tn)

        s1 = lin[0:1, :]                  # (1, tn) sum of x over channels
        sg = lin[1:2, :]                  # (1, tn) dot(x, gamma*w)
        s2 = sq[0:1, :]                   # (1, tn) sum of x^2 over channels

        mean = s1 * inv_d
        var = jnp.maximum(s2 * inv_d - mean * mean, 0.0)   # uncentered, clamped
        inv_std = jax.lax.rsqrt(var + LN_EPS)
        # score = rsqrt(var+eps) * dot(x - mean, gamma*w) + (beta@w + b)
        score_ref[b:b + 1, :] = (sg - mean * sum_gw) * inv_std + c


def _pick_tiles(batch, d, n, in_itemsize, vmem_budget_bytes=16 * 1024 * 1024):
    """Choose (bt, tn) batch / lane tile sizes.

    Constraints:
      * tn divides n and is a multiple of 128 (or tn == n when n is small /
        unaligned — block dim equal to the full array dim is always legal).
      * bt divides batch and is either == batch or a multiple of 8, so the
        (bt, tn) output block has a dense sublane dimension.
    Preferences:
      * per-step VMEM (double-buffered input + in-kernel f32/sq staging +
        double-buffered output) stays under the budget (v7x-safe);
      * the grid has >= 2 steps so the v7x megacore can split it.
    """
    def valid_bts(upper):
        return [v for v in range(1, upper + 1)
                if batch % v == 0 and (v == batch or v % 8 == 0)]

    def step_bytes(bt, tn):
        inp = 2 * bt * d * tn * in_itemsize   # double-buffered input block
        tmp = 2 * bt * d * tn * 4             # f32 upcast + squared MXU staging
        out = 2 * bt * tn * 4                 # double-buffered output block
        return inp + tmp + out

    tn = n
    if batch <= 8:
        bt = batch
    else:
        cands = valid_bts(8)
        bt = max(cands) if cands else batch

    # Shrink the lane tile first (stays a multiple of 128), then the batch tile.
    while step_bytes(bt, tn) > vmem_budget_bytes and tn % 256 == 0:
        tn //= 2
    while step_bytes(bt, tn) > vmem_budget_bytes and valid_bts(bt - 1):
        bt = max(valid_bts(bt - 1))

    # v7x megacore: make sure the "parallel" grid has >= 2 steps if possible.
    if (batch // bt) * (n // tn) < 2:
        if tn % 256 == 0:
            tn //= 2
        else:
            smaller = [v for v in valid_bts(bt - 1) if batch // v >= 2]
            if smaller:
                bt = max(smaller)
    return bt, tn


def token_scores_pallas(x_dn, ln_gamma, ln_beta, fc_w, fc_b):
    """x_dn: (B, D, N) float (channels-first tokens) -> raw scores (B, N) f32."""
    B, D, N = x_dn.shape

    # Host-side algebraic fold of LayerNorm affine + Linear(dim -> 1):
    #   score = rsqrt(var+eps) * dot(x - mean, gamma*w) + (beta@w + b)
    gw = (ln_gamma * fc_w).astype(jnp.float32)                       # (D,)
    wm = jnp.zeros((8, D), jnp.float32)
    wm = wm.at[0].set(jnp.ones((D,), jnp.float32)).at[1].set(gw)     # (8, D)
    sum_gw = jnp.sum(gw)
    c = (jnp.dot(ln_beta.astype(jnp.float32), fc_w.astype(jnp.float32))
         + fc_b[0].astype(jnp.float32))
    scal = jnp.stack([sum_gw, c]).astype(jnp.float32)                # (2,) SMEM

    bt, tn = _pick_tiles(B, D, N, jnp.dtype(x_dn.dtype).itemsize)
    grid = (B // bt, N // tn)

    scores = pl.pallas_call(
        _score_kernel,
        out_shape=jax.ShapeDtypeStruct((B, N), jnp.float32),
        grid=grid,
        in_specs=[
            pl.BlockSpec((bt, D, tn), lambda i, j: (i, 0, j)),        # tokens
            pl.BlockSpec((8, D), lambda i, j: (0, 0)),                # [ones; gw]
            pl.BlockSpec(memory_space=pltpu.MemorySpace.SMEM),        # [sum_gw, c]
        ],
        out_specs=pl.BlockSpec((bt, tn), lambda i, j: (i, j)),
        compiler_params=pltpu.CompilerParams(
            dimension_semantics=("parallel", "parallel"),
            vmem_limit_bytes=32 * 1024 * 1024),
    )(x_dn, wm, scal)
    return scores                                                     # (B, N)


def token_selector_forward(x_nchw, params, keep_ratio=0.5):
    """Mirrors TokenSelector.forward: NCHW in -> (B, num_keep, dim) out."""
    B, D, H, W = x_nchw.shape
    N = H * W
    # Free reshape — no NCHW->NHWC transpose of the full activation tensor.
    x_dn = x_nchw.reshape(B, D, N)                                    # (B, D, N)

    scores = token_scores_pallas(
        x_dn, params["ln_gamma"], params["ln_beta"],
        params["fc_w"], params["fc_b"])                               # (B, N)

    # Softmax over tokens is monotone and scores only feed top_k here, so it
    # is dropped: the selected token set/order is identical.
    num_keep = int(N * keep_ratio)
    _, idx = jax.lax.top_k(scores, num_keep)                          # (B, K)
    idx = jnp.sort(idx, axis=-1)              # matches torch `indices.sort()`

    # TODO(synk): at production sizes this gather+transpose deserves its own
    # scalar-prefetch Pallas DMA-gather emitting (B, K, D) directly; from an
    # NCHW source the per-token data is strided by H*W, so it is kept as plain
    # JAX glue here.
    idx_e = jnp.broadcast_to(idx[:, None, :], (B, D, num_keep))
    sel_dn = jnp.take_along_axis(x_dn, idx_e, axis=2)                 # (B, D, K)
    return jnp.transpose(sel_dn, (0, 2, 1))                          # (B, K, D)


if __name__ == "__main__":
    B, D, H, W = 2, 4, 16, 16
    keep_ratio = 0.5

    key = jax.random.PRNGKey(0)
    kx, kw, kb = jax.random.split(key, 3)

    x = jax.random.normal(kx, (B, D, H, W), dtype=jnp.float32)

    # Parameter shapes from nn.Linear(dim, 1) / nn.LayerNorm(dim).
    params = {
        "fc_w": jax.random.uniform(kw, (D,), jnp.float32,
                                   minval=-1.0 / jnp.sqrt(D), maxval=1.0 / jnp.sqrt(D)),
        "fc_b": jax.random.uniform(kb, (1,), jnp.float32,
                                   minval=-1.0 / jnp.sqrt(D), maxval=1.0 / jnp.sqrt(D)),
        "ln_gamma": jnp.ones((D,), jnp.float32),
        "ln_beta": jnp.zeros((D,), jnp.float32),
    }

    # Sanity check the kernel's (pre-softmax) scores against a pure-JAX
    # LayerNorm + Linear reference (loose tolerance: MXU f32 multi-pass +
    # uncentered-variance formulation).
    x_dn = x.reshape(B, D, H * W)
    scores = jax.jit(token_scores_pallas)(
        x_dn, params["ln_gamma"], params["ln_beta"], params["fc_w"], params["fc_b"])
    t = jnp.transpose(x, (0, 2, 3, 1)).reshape(B, H * W, D)
    mu = jnp.mean(t, axis=-1, keepdims=True)
    va = jnp.mean((t - mu) ** 2, axis=-1, keepdims=True)
    t_ln = (t - mu) / jnp.sqrt(va + LN_EPS) * params["ln_gamma"] + params["ln_beta"]
    ref_scores = t_ln @ params["fc_w"] + params["fc_b"][0]
    scores = jax.block_until_ready(scores)
    assert scores.shape == (B, H * W), scores.shape
    assert bool(jnp.allclose(scores, ref_scores, atol=0.1, rtol=0.1))

    fwd = jax.jit(functools.partial(token_selector_forward, keep_ratio=keep_ratio))
    out = fwd(x, params)
    out = jax.block_until_ready(out)

    expected_keep = int(H * W * keep_ratio)
    assert out.shape == (B, expected_keep, D), out.shape
    assert bool(jnp.all(jnp.isfinite(out)))
    print("KERNEL_OK")
</pallas_src>

<mosaic_0001>
module attributes {stable_mosaic.version = 11 : i64} {
  func.func @_score_kernel(%arg0: i32, %arg1: i32, %arg2: memref<2x4x128xf32, #tpu.memory_space<vmem>>, %arg3: memref<8x4xf32, #tpu.memory_space<vmem>>, %arg4: memref<2xf32, #tpu.memory_space<smem>>, %arg5: memref<2x128xf32, #tpu.memory_space<vmem>>) attributes {dimension_semantics = [#tpu.dimension_semantics<parallel>, #tpu.dimension_semantics<parallel>], iteration_bounds = array<i64: 1, 2>, scalar_prefetch = 0 : i64, scratch_operands = 0 : i64, tpu.core_type = #tpu.core_type<tc>, window_params = [{transform_indices = @transform_0, window_bounds = array<i64: 2, 4, 128>}, {pipeline_mode = #tpu.pipeline_mode<synchronous>, transform_indices = @transform_1, window_bounds = array<i64: 8, 4>}, {transform_indices = @transform_2, window_bounds = array<i64: 2>}, {transform_indices = @transform_3, window_bounds = array<i64: 2, 128>}]} {
    %c0 = arith.constant 0 : index
    %c0_0 = arith.constant 0 : index
    %0 = vector.load %arg3[%c0, %c0_0] : memref<8x4xf32, #tpu.memory_space<vmem>>, vector<8x4xf32>
    %c0_1 = arith.constant 0 : index
    %1 = memref.load %arg4[%c0_1] : memref<2xf32, #tpu.memory_space<smem>>
    %c1 = arith.constant 1 : index
    %2 = memref.load %arg4[%c1] : memref<2xf32, #tpu.memory_space<smem>>
    %c0_2 = arith.constant 0 : index
    %c0_3 = arith.constant 0 : index
    %c0_4 = arith.constant 0 : index
    %3 = vector.load %arg2[%c0_2, %c0_3, %c0_4] : memref<2x4x128xf32, #tpu.memory_space<vmem>>, vector<1x4x128xf32>
    %4 = vector.shape_cast %3 : vector<1x4x128xf32> to vector<4x128xf32>
    %cst = arith.constant dense<0.000000e+00> : vector<8x128xf32>
    %5 = tpu.matmul %0, %4, %cst {dimension_numbers = #tpu.dot_dimension_numbers<[1], [0], [0], [1], [0, 0, 1, 1], [], []>} : vector<8x4xf32>, vector<4x128xf32>, vector<8x128xf32> -> vector<8x128xf32>
    %6 = arith.mulf %4, %4 : vector<4x128xf32>
    %cst_5 = arith.constant dense<0.000000e+00> : vector<8x128xf32>
    %7 = tpu.matmul %0, %6, %cst_5 {dimension_numbers = #tpu.dot_dimension_numbers<[1], [0], [0], [1], [0, 0, 1, 1], [], []>} : vector<8x4xf32>, vector<4x128xf32>, vector<8x128xf32> -> vector<8x128xf32>
    %8 = vector.extract_strided_slice %5 {offsets = [0, 0], sizes = [1, 128], strides = [1, 1]} : vector<8x128xf32> to vector<1x128xf32>
    %9 = vector.extract_strided_slice %5 {offsets = [1, 0], sizes = [1, 128], strides = [1, 1]} : vector<8x128xf32> to vector<1x128xf32>
    %10 = vector.extract_strided_slice %7 {offsets = [0, 0], sizes = [1, 128], strides = [1, 1]} : vector<8x128xf32> to vector<1x128xf32>
    %cst_6 = arith.constant 2.500000e-01 : f32
    %11 = vector.broadcast %cst_6 : f32 to vector<1x128xf32>
    %12 = arith.mulf %8, %11 : vector<1x128xf32>
    %cst_7 = arith.constant 2.500000e-01 : f32
    %13 = vector.broadcast %cst_7 : f32 to vector<1x128xf32>
    %14 = arith.mulf %10, %13 : vector<1x128xf32>
    %15 = arith.mulf %12, %12 : vector<1x128xf32>
    %16 = arith.subf %14, %15 : vector<1x128xf32>
    %cst_8 = arith.constant 0.000000e+00 : f32
    %17 = vector.broadcast %cst_8 : f32 to vector<1x128xf32>
    %18 = arith.maximumf %16, %17 : vector<1x128xf32>
    %cst_9 = arith.constant 9.99999974E-6 : f32
    %19 = vector.broadcast %cst_9 : f32 to vector<1x128xf32>
    %20 = arith.addf %18, %19 : vector<1x128xf32>
    %21 = math.rsqrt %20 : vector<1x128xf32>
    %22 = vector.broadcast %1 : f32 to vector<1x128xf32>
    %23 = arith.mulf %12, %22 : vector<1x128xf32>
    %24 = arith.subf %9, %23 : vector<1x128xf32>
    %25 = arith.mulf %24, %21 : vector<1x128xf32>
    %26 = vector.broadcast %2 : f32 to vector<1x128xf32>
    %27 = arith.addf %25, %26 : vector<1x128xf32>
    %c0_10 = arith.constant 0 : index
    %c0_11 = arith.constant 0 : index
    %28 = vector.load %arg5[%c0_10, %c0_11] : memref<2x128xf32, #tpu.memory_space<vmem>>, vector<1x128xf32>
    tpu.vector_store %arg5[%c0_10, %c0_11], %27 {strides = array<i32>} : memref<2x128xf32, #tpu.memory_space<vmem>>, vector<1x128xf32>,
    %c1_12 = arith.constant 1 : index
    %c0_13 = arith.constant 0 : index
    %c0_14 = arith.constant 0 : index
    %29 = vector.load %arg2[%c1_12, %c0_13, %c0_14] : memref<2x4x128xf32, #tpu.memory_space<vmem>>, vector<1x4x128xf32>
    %30 = vector.shape_cast %29 : vector<1x4x128xf32> to vector<4x128xf32>
    %cst_15 = arith.constant dense<0.000000e+00> : vector<8x128xf32>
    %31 = tpu.matmul %0, %30, %cst_15 {dimension_numbers = #tpu.dot_dimension_numbers<[1], [0], [0], [1], [0, 0, 1, 1], [], []>} : vector<8x4xf32>, vector<4x128xf32>, vector<8x128xf32> -> vector<8x128xf32>
    %32 = arith.mulf %30, %30 : vector<4x128xf32>
    %cst_16 = arith.constant dense<0.000000e+00> : vector<8x128xf32>
    %33 = tpu.matmul %0, %32, %cst_16 {dimension_numbers = #tpu.dot_dimension_numbers<[1], [0], [0], [1], [0, 0, 1, 1], [], []>} : vector<8x4xf32>, vector<4x128xf32>, vector<8x128xf32> -> vector<8x128xf32>
    %34 = vector.extract_strided_slice %31 {offsets = [0, 0], sizes = [1, 128], strides = [1, 1]} : vector<8x128xf32> to vector<1x128xf32>
    %35 = vector.extract_strided_slice %31 {offsets = [1, 0], sizes = [1, 128], strides = [1, 1]} : vector<8x128xf32> to vector<1x128xf32>
    %36 = vector.extract_strided_slice %33 {offsets = [0, 0], sizes = [1, 128], strides = [1, 1]} : vector<8x128xf32> to vector<1x128xf32>
    %cst_17 = arith.constant 2.500000e-01 : f32
    %37 = vector.broadcast %cst_17 : f32 to vector<1x128xf32>
    %38 = arith.mulf %34, %37 : vector<1x128xf32>
    %cst_18 = arith.constant 2.500000e-01 : f32
    %39 = vector.broadcast %cst_18 : f32 to vector<1x128xf32>
    %40 = arith.mulf %36, %39 : vector<1x128xf32>
    %41 = arith.mulf %38, %38 : vector<1x128xf32>
    %42 = arith.subf %40, %41 : vector<1x128xf32>
    %cst_19 = arith.constant 0.000000e+00 : f32
    %43 = vector.broadcast %cst_19 : f32 to vector<1x128xf32>
    %44 = arith.maximumf %42, %43 : vector<1x128xf32>
    %cst_20 = arith.constant 9.99999974E-6 : f32
    %45 = vector.broadcast %cst_20 : f32 to vector<1x128xf32>
    %46 = arith.addf %44, %45 : vector<1x128xf32>
    %47 = math.rsqrt %46 : vector<1x128xf32>
    %48 = vector.broadcast %1 : f32 to vector<1x128xf32>
    %49 = arith.mulf %38, %48 : vector<1x128xf32>
    %50 = arith.subf %35, %49 : vector<1x128xf32>
    %51 = arith.mulf %50, %47 : vector<1x128xf32>
    %52 = vector.broadcast %2 : f32 to vector<1x128xf32>
    %53 = arith.addf %51, %52 : vector<1x128xf32>
    %c1_21 = arith.constant 1 : index
    %c0_22 = arith.constant 0 : index
    %54 = vector.load %arg5[%c1_21, %c0_22] : memref<2x128xf32, #tpu.memory_space<vmem>>, vector<1x128xf32>
    tpu.vector_store %arg5[%c1_21, %c0_22], %53 {strides = array<i32>} : memref<2x128xf32, #tpu.memory_space<vmem>>, vector<1x128xf32>,
    return
  }
  func.func @transform_0(%arg0: i32, %arg1: i32) -> (i32, i32, i32) {
    %c0_i32 = arith.constant 0 : i32
    %c0_i32_0 = arith.constant 0 : i32
    return %arg0, %c0_i32, %arg1 : i32, i32, i32
  }
  func.func @transform_1(%arg0: i32, %arg1: i32) -> (i32, i32) {
    %c0_i32 = arith.constant 0 : i32
    %c0_i32_0 = arith.constant 0 : i32
    %c0_i32_1 = arith.constant 0 : i32
    return %c0_i32, %c0_i32_0 : i32, i32
  }
  func.func @transform_2(%arg0: i32, %arg1: i32) -> i32 {
    %c0_i32 = arith.constant 0 : i32
    %c0_i32_0 = arith.constant 0 : i32
    return %c0_i32 : i32
  }
  func.func @transform_3(%arg0: i32, %arg1: i32) -> (i32, i32) {
    %c0_i32 = arith.constant 0 : i32
    return %arg0, %arg1 : i32, i32
  }
}

</mosaic_0001>

<llo_original>
// kernel: token_scores_pallas.1
$region0: #{token_scores_pallas.1}
  #allocation0 [shape = 'u32[]', space=smem, size = 0x4, offset = 0x4, fixed_abs, tag = 'smem constant byte address 0x4 - core index']
  #allocation1 [shape = 'u32[144,128]{1,0:T(1,128)}', space=vmem, size = 0x12000, scoped, tag = 'internal scratch']
  %s0 = inlined_call_operand.vmem [shape: f32[2,4,256], index: 0, kind: input, shape index: {}]
  %s1 = inlined_call_operand.vmem [shape: f32[8,4], index: 1, kind: input, shape index: {}]
  %s2 = inlined_call_operand.vmem [shape: f32[2], index: 2, kind: input, shape index: {}]
  %s3 = inlined_call_operand.hbm [shape: f32[2,256], index: 3, kind: output, shape index: {}]
  %s4 = sld [smem:[#allocation0]]
  $region90: #{token_scores_pallas.1} parent=0
    _
  %s6 = ssub.s32 1, %s4
  %s7 = scalar_select 0, %s6, %s4
  $region1: #{token_scores_pallas.1} parent=0
    #allocation2 [shape = 'u8[8192]{0}', space=vmem, size = 0x2000, scoped, tag = 'input window, operand 0']
    #allocation3 [shape = 'u8[512]{0}', space=smem, size = 0x200, scoped, tag = 'input window, operand 2, single buffered']
    #allocation4 [shape = 's32[2]{0}', space=sflag, size = 0x8, scoped, tag = 'scoped memory for token_scores_pallas.1']
    #allocation5 [shape = 's32[2]{0}', space=sflag, size = 0x8, scoped, tag = 'scoped memory for token_scores_pallas.1']
    #allocation6 [shape = 'u8[2048]{0}', space=vmem, size = 0x800, scoped, tag = 'output window, operand 0']
    %8 = vsyncpa [#allocation5], 0
    %9 = vsyncpa [#allocation4], 0
    %s10 = scalar_lea.sflag [#allocation4], 1
    %11 = vsyncpa %s10, 0
    loop: start=0, step=1, limit=4
    $region2: #{token_scores_pallas.1} parent=1 // loop_pre_header
      _
    $region3: #{token_scores_pallas.1} parent=1 // loop_header
      %s13 = sphi 0, %s17
      %p14 = scmp.ge.s32.totalorder %s13, 4
      %s20 = sphi 0, %s32
      %s21 = sphi 0, %s28
      %s22 = sphi 0, %s20
      %s23 = sphi 0, %s21
      %s24 = sphi 0, %s22
      %s25 = sphi 0, %s23
      %s37 = sphi 0, %s39
      %s40 = sphi 0, %s37
      %s41 = sphi 0, %s40
      %s57 = sphi 0, %s41
      %s61 = sphi 0, %s61
      %s63 = sphi 0, %s61
      %s64 = sphi 0, %s63
      %s78 = sphi 0, %s64
      %s82 = sphi 0, %s82
      %s84 = sphi 0, %s82
      %s85 = sphi 0, %s84
      %s99 = sphi 0, %s85
      %s107 = sphi 0, %s109
      %s110 = sphi 0, %s107
      %s111 = sphi 0, %s110
      %s127 = sphi 0, %s111
    $region4: #{token_scores_pallas.1} parent=1 // loop_header_branch
      %16 = sbr.rel (%p14) target = $region8
    $region5: #{token_scores_pallas.1} parent=1 // loop_body
      %s18 = ssub.s32 %s13, 1
      %s19 = ssub.s32 %s13, 2
      %s26 = sadd.s32 1, %s21
      %p27 = scmp.ge.s32.totalorder %s26, 2
      %s28 = scalar_select %p27, 0, %s26
      %s29 = sadd.s32 1, %s20
      %s30 = scalar_select %p27, %s29, %s20
      %p31 = scmp.ge.s32.totalorder %s30, 1
      %s32 = scalar_select %p31, 0, %s30
      %s33 = ssub.s32 %s20, %s32
      %s34 = ssub.s32 %s21, %s28
      %s35 = sor.u32 %s33, %s34
      %p36 = scmp.eq.s32.totalorder %s35, 0
      %s38 = sadd.s32 %s37, 1
      %s39 = scalar_select %p36, %s37, %s38
      %p42 = pneg %p36
      %p43 = scmp.eq.s32.totalorder %s13, 1
      %p44 = por %p42, %p43
      %p45 = scmp.ne.s32.totalorder %s37, %s40
      %p46 = scmp.eq.s32.totalorder %s13, 0
      %p47 = por %p45, %p46
      %p48 = scmp.ne.s32.totalorder %s37, %s40
      %p49 = scmp.eq.s32.totalorder %s18, 1
      %p50 = por %p48, %p49
      %p51 = scmp.ne.s32.totalorder %s40, %s41
      %p52 = scmp.eq.s32.totalorder %s18, 0
      %p53 = por %p51, %p52
      %p54 = scmp.ne.s32.totalorder %s40, %s41
      %p55 = scmp.eq.s32.totalorder %s19, 1
      %p56 = por %p54, %p55
      %p58 = scmp.ne.s32.totalorder %s41, %s57
      %p59 = scmp.eq.s32.totalorder %s19, 0
      %p60 = por %p58, %p59
      %s62 = sadd.s32 %s61, 1
      %p65 = scmp.eq.s32.totalorder %s13, 1
      %p66 = scmp.ne.s32.totalorder %s61, %s63
      %p67 = scmp.eq.s32.totalorder %s13, 0
      %p68 = por %p66, %p67
      %p69 = scmp.ne.s32.totalorder %s61, %s63
      %p70 = scmp.eq.s32.totalorder %s18, 1
      %p71 = por %p69, %p70
      %p72 = scmp.ne.s32.totalorder %s63, %s64
      %p73 = scmp.eq.s32.totalorder %s18, 0
      %p74 = por %p72, %p73
      %p75 = scmp.ne.s32.totalorder %s63, %s64
      %p76 = scmp.eq.s32.totalorder %s19, 1
      %p77 = por %p75, %p76
      %p79 = scmp.ne.s32.totalorder %s64, %s78
      %p80 = scmp.eq.s32.totalorder %s19, 0
      %p81 = por %p79, %p80
      %s83 = sadd.s32 %s82, 1
      %p86 = scmp.eq.s32.totalorder %s13, 1
      %p87 = scmp.ne.s32.totalorder %s82, %s84
      %p88 = scmp.eq.s32.totalorder %s13, 0
      %p89 = por %p87, %p88
      %p90 = scmp.ne.s32.totalorder %s82, %s84
      %p91 = scmp.eq.s32.totalorder %s18, 1
      %p92 = por %p90, %p91
      %p93 = scmp.ne.s32.totalorder %s84, %s85
      %p94 = scmp.eq.s32.totalorder %s18, 0
      %p95 = por %p93, %p94
      %p96 = scmp.ne.s32.totalorder %s84, %s85
      %p97 = scmp.eq.s32.totalorder %s19, 1
      %p98 = por %p96, %p97
      %p100 = scmp.ne.s32.totalorder %s85, %s99
      %p101 = scmp.eq.s32.totalorder %s19, 0
      %p102 = por %p100, %p101
      %s103 = ssub.s32 %s20, %s32
      %s104 = ssub.s32 %s21, %s28
      %s105 = sor.u32 %s103, %s104
      %p106 = scmp.eq.s32.totalorder %s105, 0
      %s108 = sadd.s32 %s107, 1
      %s109 = scalar_select %p106, %s107, %s108
      %p112 = pneg %p106
      %p113 = scmp.eq.s32.totalorder %s13, 1
      %p114 = por %p112, %p113
      %p115 = scmp.ne.s32.totalorder %s107, %s110
      %p116 = scmp.eq.s32.totalorder %s13, 0
      %p117 = por %p115, %p116
      %p118 = scmp.ne.s32.totalorder %s107, %s110
      %p119 = scmp.eq.s32.totalorder %s18, 1
      %p120 = por %p118, %p119
      %p121 = scmp.ne.s32.totalorder %s110, %s111
      %p122 = scmp.eq.s32.totalorder %s18, 0
      %p123 = por %p121, %p122
      %p124 = scmp.ne.s32.totalorder %s110, %s111
      %p125 = scmp.eq.s32.totalorder %s19, 1
      %p126 = por %p124, %p125
      %p128 = scmp.ne.s32.totalorder %s111, %s127
      %p129 = scmp.eq.s32.totalorder %s19, 0
      %p130 = por %p128, %p129
      %p131 = scmp.le.s32.totalorder 1, %s13
      %p132 = scmp.lt.s32.totalorder %s13, 3
      %p133 = pnand %p131, %p132
      %p134 = pneg %p133
      // Predicated region
      $region9: #{token_scores_pallas.1} parent=5 // pred_check
        _
      $region10: #{token_scores_pallas.1} parent=5 // pred_check_branch
        %136 = sbr.rel (%p133) target = $region12
      $region11: #{token_scores_pallas.1} parent=5 // pred_region
        %s137 = ssub.s32 %s13, 1
        // Predicated region
        $region13: #{token_scores_pallas.1} parent=11 // pred_check
          %p138 = pneg %p74
        $region14: #{token_scores_pallas.1} parent=11 // pred_check_branch
          %140 = sbr.rel (%p138) target = $region16
        $region15: #{token_scores_pallas.1} parent=11 // pred_region
          _
        $region16: #{token_scores_pallas.1} parent=11 // pred_fallthru
          _
        // Predicated region
        $region17: #{token_scores_pallas.1} parent=11 // pred_check
          %p141 = pneg %p95
        $region18: #{token_scores_pallas.1} parent=11 // pred_check_branch
          %143 = sbr.rel (%p141) target = $region20
        $region19: #{token_scores_pallas.1} parent=11 // pred_region
          %s145 = ssub.s32 16, 16
          %146 = vsyncadd [#allocation5], %s145
          %s148 = sshll.u32 %s2, 4
          %s149 = int_to_ptr.vmem [resolvable:$true] %s148
          %151 = dma.vmem_to_smem %s149, 16, [#allocation3], [#allocation5]
        $region20: #{token_scores_pallas.1} parent=11 // pred_fallthru
          _
      $region12: #{token_scores_pallas.1} parent=5 // pred_fallthru
        _
      %p152 = scmp.lt.s32.totalorder %s13, 2
      // Predicated region
      $region21: #{token_scores_pallas.1} parent=5 // pred_check
        %p153 = pneg %p152
      $region22: #{token_scores_pallas.1} parent=5 // pred_check_branch
        %155 = sbr.rel (%p153) target = $region24
      $region23: #{token_scores_pallas.1} parent=5 // pred_region
        // Predicated region
        $region25: #{token_scores_pallas.1} parent=23 // pred_check
          %p156 = pneg %p47
        $region26: #{token_scores_pallas.1} parent=23 // pred_check_branch
          %158 = sbr.rel (%p156) target = $region28
        $region27: #{token_scores_pallas.1} parent=23 // pred_region
          %s159 = sand.u32 %s37, 1
          %s160 = sand.u32 %s37, 1
          %s161 = smul.addr %s160, 8
          %s162 = scalar_lea.vmem [#allocation2], %s161
          %s163 = smul.u32 2, %s20
          %s164 = smul.addr %s163, 2
          %s165 = sadd.s32 %s21, %s164
          %s166 = smul.addr %s165, 4
          %s167 = scalar_lea.vmem %s0, %s166
          // Predicated region
          $region29: #{token_scores_pallas.1} parent=27 // pred_check
            _
          $region30: #{token_scores_pallas.1} parent=27 // pred_check_branch
            %169 = sbr.rel (0) target = $region32
          $region31: #{token_scores_pallas.1} parent=27 // pred_region
            // Predicated region
            $region33: #{token_scores_pallas.1} parent=31 // pred_check
              _
            $region34: #{token_scores_pallas.1} parent=31 // pred_check_branch
              %171 = sbr.rel target = $region36
            $region35: #{token_scores_pallas.1} parent=31 // pred_region
              // Predicated region
              $region48: #{token_scores_pallas.1} parent=35 // pred_check
                _
              $region49: #{token_scores_pallas.1} parent=35 // pred_check_branch
                %189 = sbr.rel (0) target = $region51
              $region50: #{token_scores_pallas.1} parent=35 // pred_region
                loop: start=0, step=1, limit=1
                $region52: #{token_scores_pallas.1} parent=50 // loop_pre_header
                  _
                $region53: #{token_scores_pallas.1} parent=50 // loop_header
                  %s191 = sphi 0, %s195
                  %p192 = scmp.ge.s32.totalorder %s191, 1
                  %s196 = sphi %s167, %s167
                  %s197 = sphi %s162, %s162
                $region54: #{token_scores_pallas.1} parent=50 // loop_header_branch
                  %194 = sbr.rel (%p192) target = $region58
                $region55: #{token_scores_pallas.1} parent=50 // loop_body
                  _
                $region56: #{token_scores_pallas.1} parent=50 // loop_footer
                  %s195 = sadd.s32 1, %s191
                $region57: #{token_scores_pallas.1} parent=50 // loop_footer_branch
                  %190 = sbr.rel target = $region53
                $region58: #{token_scores_pallas.1} parent=50 // loop_exit
                  _
                %s199 = ssub.s32 16, 1
                loop: start=0, step=1, limit=1
                $region59: #{token_scores_pallas.1} parent=50 // loop_pre_header
                  _
                $region60: #{token_scores_pallas.1} parent=50 // loop_header
                  %s201 = sphi 0, %s205
                  %p202 = scmp.ge.s32.totalorder %s201, 1
                  %s206 = sphi %s167, %s167
                  %s207 = sphi %s162, %s162
                $region61: #{token_scores_pallas.1} parent=50 // loop_header_branch
                  %204 = sbr.rel (%p202) target = $region65
                $region62: #{token_scores_pallas.1} parent=50 // loop_body
                  %v208 = vld [vmem:[%s206] sm:%s199]
                  %209 = vst [vmem:[%s207] sm:%s199] %v208
                  %v210 = vld [vmem:[%s206 + $0x8] sm:%s199]
                  %211 = vst [vmem:[%s207 + $0x4] sm:%s199] %v210
                $region63: #{token_scores_pallas.1} parent=50 // loop_footer
                  %s205 = sadd.s32 1, %s201
                $region64: #{token_scores_pallas.1} parent=50 // loop_footer_branch
                  %200 = sbr.rel target = $region60
                $region65: #{token_scores_pallas.1} parent=50 // loop_exit
                  _
              $region51: #{token_scores_pallas.1} parent=35 // pred_fallthru
                _
            $region36: #{token_scores_pallas.1} parent=31 // pred_fallthru
              _
            // Predicated region
            $region37: #{token_scores_pallas.1} parent=31 // pred_check
              _
            $region38: #{token_scores_pallas.1} parent=31 // pred_check_branch
              %173 = sbr.rel (0) target = $region40
            $region39: #{token_scores_pallas.1} parent=31 // pred_region
              %s175 = ssub.s32 16, 1
              loop: start=0, step=1, limit=1
              $region41: #{token_scores_pallas.1} parent=39 // loop_pre_header
                _
              $region42: #{token_scores_pallas.1} parent=39 // loop_header
                %s177 = sphi 0, %s181
                %p178 = scmp.ge.s32.totalorder %s177, 1
                %s182 = sphi %s167, %s167
                %s183 = sphi %s162, %s162
              $region43: #{token_scores_pallas.1} parent=39 // loop_header_branch
                %180 = sbr.rel (%p178) target = $region47
              $region44: #{token_scores_pallas.1} parent=39 // loop_body
                %v184 = vld [vmem:[%s182] sm:%s175]
                %185 = vst [vmem:[%s183] sm:%s175] %v184
                %v186 = vld [vmem:[%s182 + $0x8] sm:%s175]
                %187 = vst [vmem:[%s183 + $0x4] sm:%s175] %v186
              $region45: #{token_scores_pallas.1} parent=39 // loop_footer
                %s181 = sadd.s32 1, %s177
              $region46: #{token_scores_pallas.1} parent=39 // loop_footer_branch
                %176 = sbr.rel target = $region42
              $region47: #{token_scores_pallas.1} parent=39 // loop_exit
                _
            $region40: #{token_scores_pallas.1} parent=31 // pred_fallthru
              _
          $region32: #{token_scores_pallas.1} parent=27 // pred_fallthru
            _
          %212 = vnop
        $region28: #{token_scores_pallas.1} parent=23 // pred_fallthru
          _
      $region24: #{token_scores_pallas.1} parent=5 // pred_fallthru
        _
      %p213 = scmp.le.s32.totalorder 1, %s13
      %p214 = scmp.lt.s32.totalorder %s13, 3
      %p215 = pnand %p213, %p214
      %p216 = pneg %p215
      // Predicated region
      $region66: #{token_scores_pallas.1} parent=5 // pred_check
        _
      $region67: #{token_scores_pallas.1} parent=5 // pred_check_branch
        %218 = sbr.rel (%p215) target = $region69
      $region68: #{token_scores_pallas.1} parent=5 // pred_region
        %s219 = ssub.s32 %s13, 1
        %s220 = sand.u32 %s40, 1
        %s221 = sand.u32 %s40, 1
        %s222 = smul.addr %s221, 8
        %s223 = scalar_lea.vmem [#allocation2], %s222
        // Predicated region
        $region70: #{token_scores_pallas.1} parent=68 // pred_check
          %p224 = pneg %p53
        $region71: #{token_scores_pallas.1} parent=68 // pred_check_branch
          %226 = sbr.rel (%p224) target = $region73
        $region72: #{token_scores_pallas.1} parent=68 // pred_region
          _
        $region73: #{token_scores_pallas.1} parent=68 // pred_fallthru
          _
        // Predicated region
        $region74: #{token_scores_pallas.1} parent=68 // pred_check
          %p227 = pneg %p95
        $region75: #{token_scores_pallas.1} parent=68 // pred_check_branch
          %229 = sbr.rel (%p227) target = $region77
        $region76: #{token_scores_pallas.1} parent=68 // pred_region
          %230 = dma.done [#allocation5], 16
        $region77: #{token_scores_pallas.1} parent=68 // pred_fallthru
          _
        %231 = sfence
        %s232 = sand.u32 %s40, 1
        %s233 = sand.u32 %s40, 1
        %s234 = smul.addr %s233, 8
        %s235 = scalar_lea.vmem [#allocation2], %s234
        %p236 = pneg %p53
        %p237 = pneg %p50
        %p238 = pneg %p74
        %p239 = pneg %p71
        %p240 = pneg %p95
        %p241 = pneg %p92
        %p242 = pneg %p123
        %p243 = pneg %p120
        %s244 = sand.u32 %s110, 1
        %s245 = scalar_lea.sflag [#allocation4], %s244
        %s246 = sand.u32 %s110, 1
        %s247 = smul.addr %s246, 2
        %s248 = scalar_lea.vmem [#allocation6], %s247
        %s249 = smul.u32 2, %s22
        %v250 = vld [vmem:[%s1] sm:$0xff]
        %s251 = sld [smem:[#allocation3]]
        %s252 = sld [smem:[#allocation3 + $0x1]]
        %v253 = vld [vmem:[%s223] sm:$0xf]
        %vm254 = vcmask 31744
        %v256 = vsel %vm254, %v250, 0
        %vm258 = vcmask 1043456
        %v260 = vsel %vm258, %v253, 0
        %262 = vmatprep.subr.mxu0 0.0
        %263 = vmatpush1.msra.mxu0 0.0
        %264 = vmatprep.subr.mxu0 0.0
        %265 = vmatpush1.msra.mxu0 0.0
        %266 = vmatprep.subr.mxu0 0.0
        %267 = vmatpush1.msra.mxu0 0.0
        %268 = vmatprep.subr.mxu0 0.0
        %269 = vmatpush1.msra.mxu0 0.0
        %270 = vmatprep.subr.mxu0 0.0
        %271 = vmatpush1.msra.mxu0 0.0
        %272 = vmatprep.subr.mxu0 0.0
        %273 = vmatpush1.msra.mxu0 0.0
        %274 = vmatprep.subr.mxu0 0.0
        %275 = vmatpush1.msra.mxu0 0.0
        %276 = vmatprep.subr.mxu0 0.0
        %277 = vmatpush1.msra.mxu0 0.0
        %278 = vmatprep.subr.mxu0 0.0
        %279 = vmatpush1.msra.mxu0 0.0
        %280 = vmatprep.subr.mxu0 0.0
        %281 = vmatpush1.msra.mxu0 0.0
        %282 = vmatprep.subr.mxu0 0.0
        %283 = vmatpush1.msra.mxu0 0.0
        %284 = vmatprep.subr.mxu0 0.0
        %285 = vmatpush1.msra.mxu0 0.0
        %286 = vmatprep.subr.mxu0 0.0
        %287 = vmatpush1.msra.mxu0 0.0
        %288 = vmatprep.subr.mxu0 0.0
        %289 = vmatpush1.msra.mxu0 0.0
        %290 = vmatprep.subr.mxu0 0.0
        %291 = vmatpush1.msra.mxu0 0.0
        %292 = vmatprep.subr.mxu0 0.0
        %293 = vmatpush1.msra.mxu0 %v260
        %294 = vmatprep.subr.mxu0 0.0
        %295 = vmatpush2.msra.mxu0 0.0
        %296 = vmatprep.subr.mxu0 0.0
        %297 = vmatpush2.msra.mxu0 0.0
        %298 = vmatprep.subr.mxu0 0.0
        %299 = vmatpush2.msra.mxu0 0.0
        %300 = vmatprep.subr.mxu0 0.0
        %301 = vmatpush2.msra.mxu0 0.0
        %302 = vmatprep.subr.mxu0 0.0
        %303 = vmatpush2.msra.mxu0 0.0
        %304 = vmatprep.subr.mxu0 0.0
        %305 = vmatpush2.msra.mxu0 0.0
        %306 = vmatprep.subr.mxu0 0.0
        %307 = vmatpush2.msra.mxu0 0.0
        %308 = vmatprep.subr.mxu0 0.0
        %309 = vmatpush2.msra.mxu0 0.0
        %310 = vmatprep.subr.mxu0 0.0
        %311 = vmatpush2.msra.mxu0 0.0
        %312 = vmatprep.subr.mxu0 0.0
        %313 = vmatpush2.msra.mxu0 0.0
        %314 = vmatprep.subr.mxu0 0.0
        %315 = vmatpush2.msra.mxu0 0.0
        %316 = vmatprep.subr.mxu0 0.0
        %317 = vmatpush2.msra.mxu0 0.0
        %318 = vmatprep.subr.mxu0 0.0
        %319 = vmatpush2.msra.mxu0 0.0
        %320 = vmatprep.subr.mxu0 0.0
        %321 = vmatpush2.msra.mxu0 0.0
        %322 = vmatprep.subr.mxu0 0.0
        %323 = vmatpush2.msra.mxu0 0.0
        %324 = vmatprep.subr.mxu0 0.0
        %325 = vmatpush2.msra.mxu0 0.0
        %326 = vmatprep.mubr.f32.mxu0 0.0
        %327 = vmatmul.mubr.f32.gmra.mxu0 %v256
        %v328 = vpop.f32.mrf.mxu0
        %v329 = vadd.f32 0.0, %v328
        %v330 = vpop.f32.mrf.mxu0
        %331 = vdwg.mxu0
        %v332 = vmul.f32 %v253, %v253
        %v334 = vsel %vm258, %v332, 0
        %336 = vmatprep.subr.mxu0 0.0
        %337 = vmatpush1.msra.mxu0 0.0
        %338 = vmatprep.subr.mxu0 0.0
        %339 = vmatpush1.msra.mxu0 0.0
        %340 = vmatprep.subr.mxu0 0.0
        %341 = vmatpush1.msra.mxu0 0.0
        %342 = vmatprep.subr.mxu0 0.0
        %343 = vmatpush1.msra.mxu0 0.0
        %344 = vmatprep.subr.mxu0 0.0
        %345 = vmatpush1.msra.mxu0 0.0
        %346 = vmatprep.subr.mxu0 0.0
        %347 = vmatpush1.msra.mxu0 0.0
        %348 = vmatprep.subr.mxu0 0.0
        %349 = vmatpush1.msra.mxu0 0.0
        %350 = vmatprep.subr.mxu0 0.0
        %351 = vmatpush1.msra.mxu0 0.0
        %352 = vmatprep.subr.mxu0 0.0
        %353 = vmatpush1.msra.mxu0 0.0
        %354 = vmatprep.subr.mxu0 0.0
        %355 = vmatpush1.msra.mxu0 0.0
        %356 = vmatprep.subr.mxu0 0.0
        %357 = vmatpush1.msra.mxu0 0.0
        %358 = vmatprep.subr.mxu0 0.0
        %359 = vmatpush1.msra.mxu0 0.0
        %360 = vmatprep.subr.mxu0 0.0
        %361 = vmatpush1.msra.mxu0 0.0
        %362 = vmatprep.subr.mxu0 0.0
        %363 = vmatpush1.msra.mxu0 0.0
        %364 = vmatprep.subr.mxu0 0.0
        %365 = vmatpush1.msra.mxu0 0.0
        %366 = vmatprep.subr.mxu0 0.0
        %367 = vmatpush1.msra.mxu0 %v334
        %368 = vmatprep.subr.mxu0 0.0
        %369 = vmatpush2.msra.mxu0 0.0
        %370 = vmatprep.subr.mxu0 0.0
        %371 = vmatpush2.msra.mxu0 0.0
        %372 = vmatprep.subr.mxu0 0.0
        %373 = vmatpush2.msra.mxu0 0.0
        %374 = vmatprep.subr.mxu0 0.0
        %375 = vmatpush2.msra.mxu0 0.0
        %376 = vmatprep.subr.mxu0 0.0
        %377 = vmatpush2.msra.mxu0 0.0
        %378 = vmatprep.subr.mxu0 0.0
        %379 = vmatpush2.msra.mxu0 0.0
        %380 = vmatprep.subr.mxu0 0.0
        %381 = vmatpush2.msra.mxu0 0.0
        %382 = vmatprep.subr.mxu0 0.0
        %383 = vmatpush2.msra.mxu0 0.0
        %384 = vmatprep.subr.mxu0 0.0
        %385 = vmatpush2.msra.mxu0 0.0
        %386 = vmatprep.subr.mxu0 0.0
        %387 = vmatpush2.msra.mxu0 0.0
        %388 = vmatprep.subr.mxu0 0.0
        %389 = vmatpush2.msra.mxu0 0.0
        %390 = vmatprep.subr.mxu0 0.0
        %391 = vmatpush2.msra.mxu0 0.0
        %392 = vmatprep.subr.mxu0 0.0
        %393 = vmatpush2.msra.mxu0 0.0
        %394 = vmatprep.subr.mxu0 0.0
        %395 = vmatpush2.msra.mxu0 0.0
        %396 = vmatprep.subr.mxu0 0.0
        %397 = vmatpush2.msra.mxu0 0.0
        %398 = vmatprep.subr.mxu0 0.0
        %399 = vmatpush2.msra.mxu0 0.0
        %400 = vmatprep.mubr.f32.mxu0 0.0
        %401 = vmatmul.mubr.f32.gmra.mxu0 %v256
        %v402 = vpop.f32.mrf.mxu0
        %v403 = vadd.f32 0.0, %v402
        %v404 = vpop.f32.mrf.mxu0
        %405 = vdwg.mxu0
        %v406 = vmul.f32 %v329, 0.25
        %v407 = vmul.f32 %v403, 0.25
        %v408 = vmul.f32 %v406, %v406
        %v409 = vsub.f32 %v407, %v408
        %v410 = vmax.f32 %v409, 0.0
        %v411 = vadd.f32 %v410, 1e-05
        %v412 = vrsqrt.pop %v411
        %v413 = vstv %s251
        %v414 = vmul.f32 %v406, %v413
        %v416 = vrot.slane %v414, 7
        %v418 = vsub.f32 %v329, %v416
        %v420 = vrot.slane %v412, 7
        %v422 = vmul.f32 %v418, %v420
        %v423 = vstv %s252
        %v424 = vadd.f32 %v422, %v423
        %425 = vst [vmem:[%s248 - $0x1] sm:$0x2] %v424
        %s426 = scalar_lea.vmem %s223, 4 [#allocation2]
        %v427 = vld [vmem:[%s426] sm:$0xf]
        %v429 = vsel %vm258, %v427, 0
        %431 = vmatprep.subr.mxu0 0.0
        %432 = vmatpush1.msra.mxu0 0.0
        %433 = vmatprep.subr.mxu0 0.0
        %434 = vmatpush1.msra.mxu0 0.0
        %435 = vmatprep.subr.mxu0 0.0
        %436 = vmatpush1.msra.mxu0 0.0
        %437 = vmatprep.subr.mxu0 0.0
        %438 = vmatpush1.msra.mxu0 0.0
        %439 = vmatprep.subr.mxu0 0.0
        %440 = vmatpush1.msra.mxu0 0.0
        %441 = vmatprep.subr.mxu0 0.0
        %442 = vmatpush1.msra.mxu0 0.0
        %443 = vmatprep.subr.mxu0 0.0
        %444 = vmatpush1.msra.mxu0 0.0
        %445 = vmatprep.subr.mxu0 0.0
        %446 = vmatpush1.msra.mxu0 0.0
        %447 = vmatprep.subr.mxu0 0.0
        %448 = vmatpush1.msra.mxu0 0.0
        %449 = vmatprep.subr.mxu0 0.0
        %450 = vmatpush1.msra.mxu0 0.0
        %451 = vmatprep.subr.mxu0 0.0
        %452 = vmatpush1.msra.mxu0 0.0
        %453 = vmatprep.subr.mxu0 0.0
        %454 = vmatpush1.msra.mxu0 0.0
        %455 = vmatprep.subr.mxu0 0.0
        %456 = vmatpush1.msra.mxu0 0.0
        %457 = vmatprep.subr.mxu0 0.0
        %458 = vmatpush1.msra.mxu0 0.0
        %459 = vmatprep.subr.mxu0 0.0
        %460 = vmatpush1.msra.mxu0 0.0
        %461 = vmatprep.subr.mxu0 0.0
        %462 = vmatpush1.msra.mxu0 %v429
        %463 = vmatprep.subr.mxu0 0.0
        %464 = vmatpush2.msra.mxu0 0.0
        %465 = vmatprep.subr.mxu0 0.0
        %466 = vmatpush2.msra.mxu0 0.0
        %467 = vmatprep.subr.mxu0 0.0
        %468 = vmatpush2.msra.mxu0 0.0
        %469 = vmatprep.subr.mxu0 0.0
        %470 = vmatpush2.msra.mxu0 0.0
        %471 = vmatprep.subr.mxu0 0.0
        %472 = vmatpush2.msra.mxu0 0.0
        %473 = vmatprep.subr.mxu0 0.0
        %474 = vmatpush2.msra.mxu0 0.0
        %475 = vmatprep.subr.mxu0 0.0
        %476 = vmatpush2.msra.mxu0 0.0
        %477 = vmatprep.subr.mxu0 0.0
        %478 = vmatpush2.msra.mxu0 0.0
        %479 = vmatprep.subr.mxu0 0.0
        %480 = vmatpush2.msra.mxu0 0.0
        %481 = vmatprep.subr.mxu0 0.0
        %482 = vmatpush2.msra.mxu0 0.0
        %483 = vmatprep.subr.mxu0 0.0
        %484 = vmatpush2.msra.mxu0 0.0
        %485 = vmatprep.subr.mxu0 0.0
        %486 = vmatpush2.msra.mxu0 0.0
        %487 = vmatprep.subr.mxu0 0.0
        %488 = vmatpush2.msra.mxu0 0.0
        %489 = vmatprep.subr.mxu0 0.0
        %490 = vmatpush2.msra.mxu0 0.0
        %491 = vmatprep.subr.mxu0 0.0
        %492 = vmatpush2.msra.mxu0 0.0
        %493 = vmatprep.subr.mxu0 0.0
        %494 = vmatpush2.msra.mxu0 0.0
        %495 = vmatprep.mubr.f32.mxu0 0.0
        %496 = vmatmul.mubr.f32.gmra.mxu0 %v256
        %v497 = vpop.f32.mrf.mxu0
        %v498 = vadd.f32 0.0, %v497
        %v499 = vpop.f32.mrf.mxu0
        %500 = vdwg.mxu0
        %v501 = vmul.f32 %v427, %v427
        %v503 = vsel %vm258, %v501, 0
        %505 = vmatprep.subr.mxu0 0.0
        %506 = vmatpush1.msra.mxu0 0.0
        %507 = vmatprep.subr.mxu0 0.0
        %508 = vmatpush1.msra.mxu0 0.0
        %509 = vmatprep.subr.mxu0 0.0
        %510 = vmatpush1.msra.mxu0 0.0
        %511 = vmatprep.subr.mxu0 0.0
        %512 = vmatpush1.msra.mxu0 0.0
        %513 = vmatprep.subr.mxu0 0.0
        %514 = vmatpush1.msra.mxu0 0.0
        %515 = vmatprep.subr.mxu0 0.0
        %516 = vmatpush1.msra.mxu0 0.0
        %517 = vmatprep.subr.mxu0 0.0
        %518 = vmatpush1.msra.mxu0 0.0
        %519 = vmatprep.subr.mxu0 0.0
        %520 = vmatpush1.msra.mxu0 0.0
        %521 = vmatprep.subr.mxu0 0.0
        %522 = vmatpush1.msra.mxu0 0.0
        %523 = vmatprep.subr.mxu0 0.0
        %524 = vmatpush1.msra.mxu0 0.0
        %525 = vmatprep.subr.mxu0 0.0
        %526 = vmatpush1.msra.mxu0 0.0
        %527 = vmatprep.subr.mxu0 0.0
        %528 = vmatpush1.msra.mxu0 0.0
        %529 = vmatprep.subr.mxu0 0.0
        %530 = vmatpush1.msra.mxu0 0.0
        %531 = vmatprep.subr.mxu0 0.0
        %532 = vmatpush1.msra.mxu0 0.0
        %533 = vmatprep.subr.mxu0 0.0
        %534 = vmatpush1.msra.mxu0 0.0
        %535 = vmatprep.subr.mxu0 0.0
        %536 = vmatpush1.msra.mxu0 %v503
        %537 = vmatprep.subr.mxu0 0.0
        %538 = vmatpush2.msra.mxu0 0.0
        %539 = vmatprep.subr.mxu0 0.0
        %540 = vmatpush2.msra.mxu0 0.0
        %541 = vmatprep.subr.mxu0 0.0
        %542 = vmatpush2.msra.mxu0 0.0
        %543 = vmatprep.subr.mxu0 0.0
        %544 = vmatpush2.msra.mxu0 0.0
        %545 = vmatprep.subr.mxu0 0.0
        %546 = vmatpush2.msra.mxu0 0.0
        %547 = vmatprep.subr.mxu0 0.0
        %548 = vmatpush2.msra.mxu0 0.0
        %549 = vmatprep.subr.mxu0 0.0
        %550 = vmatpush2.msra.mxu0 0.0
        %551 = vmatprep.subr.mxu0 0.0
        %552 = vmatpush2.msra.mxu0 0.0
        %553 = vmatprep.subr.mxu0 0.0
        %554 = vmatpush2.msra.mxu0 0.0
        %555 = vmatprep.subr.mxu0 0.0
        %556 = vmatpush2.msra.mxu0 0.0
        %557 = vmatprep.subr.mxu0 0.0
        %558 = vmatpush2.msra.mxu0 0.0
        %559 = vmatprep.subr.mxu0 0.0
        %560 = vmatpush2.msra.mxu0 0.0
        %561 = vmatprep.subr.mxu0 0.0
        %562 = vmatpush2.msra.mxu0 0.0
        %563 = vmatprep.subr.mxu0 0.0
        %564 = vmatpush2.msra.mxu0 0.0
        %565 = vmatprep.subr.mxu0 0.0
        %566 = vmatpush2.msra.mxu0 0.0
        %567 = vmatprep.subr.mxu0 0.0
        %568 = vmatpush2.msra.mxu0 0.0
        %569 = vmatprep.mubr.f32.mxu0 0.0
        %570 = vmatmul.mubr.f32.gmra.mxu0 %v256
        %v571 = vpop.f32.mrf.mxu0
        %v572 = vadd.f32 0.0, %v571
        %v573 = vpop.f32.mrf.mxu0
        %574 = vdwg.mxu0
        %v575 = vmul.f32 %v498, 0.25
        %v576 = vmul.f32 %v572, 0.25
        %v577 = vmul.f32 %v575, %v575
        %v578 = vsub.f32 %v576, %v577
        %v579 = vmax.f32 %v578, 0.0
        %v580 = vadd.f32 %v579, 1e-05
        %v581 = vrsqrt.pop %v580
        %v582 = vmul.f32 %v575, %v413
        %v584 = vrot.slane %v582, 7
        %v586 = vsub.f32 %v498, %v584
        %v588 = vrot.slane %v581, 7
        %v590 = vmul.f32 %v586, %v588
        %v591 = vadd.f32 %v590, %v423
        %592 = vst [vmem:[%s248] sm:$0x2] %v591
        %s593 = sand.u32 %s110, 1
        %s594 = scalar_lea.sflag [#allocation4], %s593
        %s595 = sand.u32 %s110, 1
        %s596 = smul.addr %s595, 2
        %s597 = scalar_lea.vmem [#allocation6], %s596
        // Predicated region
        $region78: #{token_scores_pallas.1} parent=68 // pred_check
          %p598 = pneg %p120
        $region79: #{token_scores_pallas.1} parent=68 // pred_check_branch
          %600 = sbr.rel (%p598) target = $region81
        $region80: #{token_scores_pallas.1} parent=68 // pred_region
          %s602 = ssub.s32 32, 32
          %603 = vsyncadd %s594, %s602
          %s604 = smul.addr %s22, 2
          %s605 = sadd.s32 %s23, %s604
          %s606 = smul.addr %s605, 32
          %s607 = scalar_lea.hbm %s3, %s606
          %s609 = sshll.u32 %s597, 4
          %s610 = int_to_ptr.vmem [resolvable:$true] %s609
          %612 = dma.vmem_to_hbm [thread:$0]  %s610, 32, %s607, %s594
        $region81: #{token_scores_pallas.1} parent=68 // pred_fallthru
          _
      $region69: #{token_scores_pallas.1} parent=5 // pred_fallthru
        _
      %p613 = scmp.le.s32.totalorder 2, %s13
      // Predicated region
      $region82: #{token_scores_pallas.1} parent=5 // pred_check
        %p614 = pneg %p613
      $region83: #{token_scores_pallas.1} parent=5 // pred_check_branch
        %616 = sbr.rel (%p614) target = $region85
      $region84: #{token_scores_pallas.1} parent=5 // pred_region
        %s617 = ssub.s32 %s13, 2
        // Predicated region
        $region86: #{token_scores_pallas.1} parent=84 // pred_check
          %p618 = pneg %p126
        $region87: #{token_scores_pallas.1} parent=84 // pred_check_branch
          %620 = sbr.rel (%p618) target = $region89
        $region88: #{token_scores_pallas.1} parent=84 // pred_region
          %s621 = sand.u32 %s111, 1
          %s622 = scalar_lea.sflag [#allocation4], %s621
          %s623 = sand.u32 %s111, 1
          %s624 = smul.addr %s623, 2
          %s625 = scalar_lea.vmem [#allocation6], %s624
          %626 = dma.done %s622, 32
        $region89: #{token_scores_pallas.1} parent=84 // pred_fallthru
          _
      $region85: #{token_scores_pallas.1} parent=5 // pred_fallthru
        _
    $region6: #{token_scores_pallas.1} parent=1 // loop_footer
      %s17 = sadd.s32 1, %s13
    $region7: #{token_scores_pallas.1} parent=1 // loop_footer_branch
      %12 = sbr.rel target = $region3
    $region8: #{token_scores_pallas.1} parent=1 // loop_exit
      _
    %627 = vsyncpa [#allocation4], 1
    %s628 = scalar_lea.sflag [#allocation4], 1
    %629 = vsyncpa %s628, 1
    %630 = vsyncpa [#allocation5], 1
    %s631 = scalar_lea.sflag [#allocation5], 1
    %632 = vsyncpa %s631, 1

</llo_original>
